<compile_context>
chip_gen: v7x
topology: tpu7x:2x2x1
jax: 0.10.0
libtpu: 0.0.40
codegen_flags: <defaults>
</compile_context>

<pallas_src>
import jax
import jax.numpy as jnp
from jax.experimental import pallas as pl
from jax.experimental.pallas import tpu as pltpu


def _round_up(n, m):
    return ((n + m - 1) // m) * m


def _ssm_kernel(xT_ref, uT_ref, w1xT_ref, w1uT_ref, b1_ref, w2_ref, b2_ref, o_ref):
    # xT:   [S, TB]   uT:   [A, TB]      (batch on lanes)
    # w1xT: [H, S]    w1uT: [H, A]       b1: [H, 1]
    # w2:   [H, 1]    b2:   [1, 1]
    # o:    [1, TB]                      (lane-dense output row)
    hT = jnp.dot(w1xT_ref[...], xT_ref[...], preferred_element_type=jnp.float32)
    hT = hT + jnp.dot(w1uT_ref[...], uT_ref[...], preferred_element_type=jnp.float32)
    hT = jnp.maximum(hT + b1_ref[...], 0.0)                       # [H, TB]
    # Second layer (H -> 1): VPU multiply + sublane reduction -> lane-dense row.
    oT = jnp.sum(hT * w2_ref[...], axis=0, keepdims=True) + b2_ref[...]
    o_ref[...] = oT.astype(o_ref.dtype)


def simple_ssm_forward(x, u, w1, b1, w2, b2, *, tile_b=None):
    """x: [B, S], u: [B, A], w1: [S+A, H], b1: [H], w2: [H, 1], b2: [1] -> [B, 1]"""
    B, S = x.shape
    _, A = u.shape
    H = w1.shape[1]

    # Batch tile: lane-dense (multiple of 128). Default: as large as 64K samples
    # (a few MiB of VMEM in the lane-dense layout, safe under the 16/32 MiB scoped
    # defaults of v5e/v6e/v7x), but no larger than ceil(B/2) so grid_b >= 2 and
    # v7x's two TensorCores both get work.
    if tile_b is None:
        tile_b = min(65536, max(128, _round_up(pl.cdiv(B, 2), 128)))
    tile_b = max(128, _round_up(tile_b, 128))

    # Ragged last block instead of padding the whole input (jnp.pad would be a
    # full extra HBM read+write pass). OOB output writes are masked; garbage tail
    # input columns only affect their own (masked / unread) output columns.
    grid_b = pl.cdiv(B, tile_b)

    # Batch-on-lanes input layout for dense, wide HBM->VMEM DMA bursts.
    xT = jnp.transpose(x)                # [S, B]
    uT = jnp.transpose(u)                # [A, B]

    # Split + transpose the (tiny) weights so concat is fused into the kernel.
    w1xT = jnp.transpose(w1[:S, :])      # [H, S]
    w1uT = jnp.transpose(w1[S:, :])      # [H, A]
    b1c = b1.reshape(H, 1)
    w2c = w2.reshape(H, 1)
    b2c = b2.reshape(1, 1)

    cost = pl.CostEstimate(
        flops=int(2 * B * (S + A) * H + 2 * B * H),
        transcendentals=0,
        bytes_accessed=int(4 * B * (S + A + 1) + 4 * ((S + A) * H + 2 * H + 1)),
    )

    out = pl.pallas_call(
        _ssm_kernel,
        out_shape=jax.ShapeDtypeStruct((1, B), x.dtype),
        grid=(grid_b,),
        in_specs=[
            pl.BlockSpec((S, tile_b), lambda i: (0, i)),   # xT tile (lane-dense)
            pl.BlockSpec((A, tile_b), lambda i: (0, i)),   # uT tile (lane-dense)
            pl.BlockSpec((H, S), lambda i: (0, 0)),        # w1xT (VMEM-resident)
            pl.BlockSpec((H, A), lambda i: (0, 0)),        # w1uT
            pl.BlockSpec((H, 1), lambda i: (0, 0)),        # b1
            pl.BlockSpec((H, 1), lambda i: (0, 0)),        # w2
            pl.BlockSpec((1, 1), lambda i: (0, 0)),        # b2
        ],
        out_specs=pl.BlockSpec((1, tile_b), lambda i: (0, i)),
        compiler_params=pltpu.CompilerParams(
            dimension_semantics=("parallel",),
            vmem_limit_bytes=32 * 1024 * 1024,
        ),
        cost_estimate=cost,
    )(xT, uT, w1xT, w1uT, b1c, w2c, b2c)

    return out.reshape(B, 1)


def init_params(key, state_dim, action_dim, hidden=16, out=1, dtype=jnp.float32):
    """Deterministic init mimicking nn.Linear's U(-1/sqrt(fan_in), 1/sqrt(fan_in))."""
    k1, k2, k3, k4 = jax.random.split(key, 4)
    fan1 = state_dim + action_dim
    lim1 = 1.0 / jnp.sqrt(jnp.asarray(fan1, dtype))
    lim2 = 1.0 / jnp.sqrt(jnp.asarray(hidden, dtype))
    w1 = jax.random.uniform(k1, (fan1, hidden), dtype, -lim1, lim1)
    b1 = jax.random.uniform(k2, (hidden,), dtype, -lim1, lim1)
    w2 = jax.random.uniform(k3, (hidden, out), dtype, -lim2, lim2)
    b2 = jax.random.uniform(k4, (out,), dtype, -lim2, lim2)
    return w1, b1, w2, b2


def _reference(x, u, w1, b1, w2, b2):
    inp = jnp.concatenate([x, u], axis=-1)
    return jnp.maximum(inp @ w1 + b1, 0.0) @ w2 + b2


if __name__ == "__main__":
    state_dim, action_dim = 4, 4
    key = jax.random.PRNGKey(0)
    kx, ku, kp = jax.random.split(key, 3)
    w1, b1, w2, b2 = init_params(kp, state_dim, action_dim)

    # Small-shape check (single ragged block: B=8 < tile_b).
    batch = 8
    x = jax.random.normal(kx, (batch, state_dim), jnp.float32)
    u = jax.random.normal(ku, (batch, action_dim), jnp.float32)
    out = jax.block_until_ready(simple_ssm_forward(x, u, w1, b1, w2, b2))
    ref = _reference(x, u, w1, b1, w2, b2)
    assert out.shape == (batch, 1), out.shape
    assert jnp.allclose(out, ref, atol=1e-5, rtol=1e-5), "mismatch vs reference"

    # Multi-step grid with a ragged last block (B=200, tile_b=128 -> grid=2).
    batch2 = 200
    kx2, ku2 = jax.random.split(jax.random.PRNGKey(1), 2)
    x2 = jax.random.normal(kx2, (batch2, state_dim), jnp.float32)
    u2 = jax.random.normal(ku2, (batch2, action_dim), jnp.float32)
    out2 = jax.block_until_ready(
        simple_ssm_forward(x2, u2, w1, b1, w2, b2, tile_b=128))
    ref2 = _reference(x2, u2, w1, b1, w2, b2)
    assert out2.shape == (batch2, 1), out2.shape
    assert jnp.allclose(out2, ref2, atol=1e-5, rtol=1e-5), "mismatch vs reference (ragged)"

    print("KERNEL_OK")
</pallas_src>

<mosaic_0001>
module attributes {stable_mosaic.version = 11 : i64} {
  func.func @_ssm_kernel(%arg0: i32, %arg1: memref<4x128xf32, #tpu.memory_space<vmem>>, %arg2: memref<4x128xf32, #tpu.memory_space<vmem>>, %arg3: memref<16x4xf32, #tpu.memory_space<vmem>>, %arg4: memref<16x4xf32, #tpu.memory_space<vmem>>, %arg5: memref<16x1xf32, #tpu.memory_space<vmem>>, %arg6: memref<16x1xf32, #tpu.memory_space<vmem>>, %arg7: memref<1x1xf32, #tpu.memory_space<vmem>>, %arg8: memref<1x128xf32, #tpu.memory_space<vmem>>) attributes {dimension_semantics = [#tpu.dimension_semantics<parallel>], iteration_bounds = array<i64: 1>, scalar_prefetch = 0 : i64, scratch_operands = 0 : i64, tpu.core_type = #tpu.core_type<tc>, window_params = [{transform_indices = @transform_0, window_bounds = array<i64: 4, 128>}, {transform_indices = @transform_1, window_bounds = array<i64: 4, 128>}, {pipeline_mode = #tpu.pipeline_mode<synchronous>, transform_indices = @transform_2, window_bounds = array<i64: 16, 4>}, {pipeline_mode = #tpu.pipeline_mode<synchronous>, transform_indices = @transform_3, window_bounds = array<i64: 16, 4>}, {pipeline_mode = #tpu.pipeline_mode<synchronous>, transform_indices = @transform_4, window_bounds = array<i64: 16, 1>}, {pipeline_mode = #tpu.pipeline_mode<synchronous>, transform_indices = @transform_5, window_bounds = array<i64: 16, 1>}, {pipeline_mode = #tpu.pipeline_mode<synchronous>, transform_indices = @transform_6, window_bounds = array<i64: 1, 1>}, {transform_indices = @transform_7, window_bounds = array<i64: 1, 128>}]} {
    %c0 = arith.constant 0 : index
    %c0_0 = arith.constant 0 : index
    %0 = vector.load %arg3[%c0, %c0_0] : memref<16x4xf32, #tpu.memory_space<vmem>>, vector<16x4xf32>
    %c0_1 = arith.constant 0 : index
    %c0_2 = arith.constant 0 : index
    %1 = vector.load %arg1[%c0_1, %c0_2] : memref<4x128xf32, #tpu.memory_space<vmem>>, vector<4x128xf32>
    %cst = arith.constant dense<0.000000e+00> : vector<16x128xf32>
    %2 = tpu.matmul %0, %1, %cst {dimension_numbers = #tpu.dot_dimension_numbers<[1], [0], [0], [1], [0, 0, 1, 1], [], []>} : vector<16x4xf32>, vector<4x128xf32>, vector<16x128xf32> -> vector<16x128xf32>
    %c0_3 = arith.constant 0 : index
    %c0_4 = arith.constant 0 : index
    %3 = vector.load %arg4[%c0_3, %c0_4] : memref<16x4xf32, #tpu.memory_space<vmem>>, vector<16x4xf32>
    %c0_5 = arith.constant 0 : index
    %c0_6 = arith.constant 0 : index
    %4 = vector.load %arg2[%c0_5, %c0_6] : memref<4x128xf32, #tpu.memory_space<vmem>>, vector<4x128xf32>
    %cst_7 = arith.constant dense<0.000000e+00> : vector<16x128xf32>
    %5 = tpu.matmul %3, %4, %cst_7 {dimension_numbers = #tpu.dot_dimension_numbers<[1], [0], [0], [1], [0, 0, 1, 1], [], []>} : vector<16x4xf32>, vector<4x128xf32>, vector<16x128xf32> -> vector<16x128xf32>
    %6 = arith.addf %2, %5 : vector<16x128xf32>
    %c0_8 = arith.constant 0 : index
    %c0_9 = arith.constant 0 : index
    %7 = vector.load %arg5[%c0_8, %c0_9] : memref<16x1xf32, #tpu.memory_space<vmem>>, vector<16x1xf32>
    %8 = vector.broadcast %7 : vector<16x1xf32> to vector<16x128xf32>
    %9 = arith.addf %6, %8 : vector<16x128xf32>
    %cst_10 = arith.constant 0.000000e+00 : f32
    %10 = vector.broadcast %cst_10 : f32 to vector<16x128xf32>
    %11 = arith.maximumf %9, %10 : vector<16x128xf32>
    %c0_11 = arith.constant 0 : index
    %c0_12 = arith.constant 0 : index
    %12 = vector.load %arg6[%c0_11, %c0_12] : memref<16x1xf32, #tpu.memory_space<vmem>>, vector<16x1xf32>
    %13 = vector.broadcast %12 : vector<16x1xf32> to vector<16x128xf32>
    %14 = arith.mulf %11, %13 : vector<16x128xf32>
    %cst_13 = arith.constant dense<0.000000e+00> : vector<128xf32>
    %15 = vector.multi_reduction <add>, %14, %cst_13 [0] : vector<16x128xf32> to vector<128xf32>
    %16 = vector.shape_cast %15 : vector<128xf32> to vector<1x128xf32>
    %c0_14 = arith.constant 0 : index
    %c0_15 = arith.constant 0 : index
    %17 = vector.load %arg7[%c0_14, %c0_15] : memref<1x1xf32, #tpu.memory_space<vmem>>, vector<1x1xf32>
    %18 = vector.broadcast %17 : vector<1x1xf32> to vector<1x128xf32>
    %19 = arith.addf %16, %18 : vector<1x128xf32>
    %c0_16 = arith.constant 0 : index
    %c0_17 = arith.constant 0 : index
    %20 = vector.load %arg8[%c0_16, %c0_17] : memref<1x128xf32, #tpu.memory_space<vmem>>, vector<1x128xf32>
    tpu.vector_store %arg8[%c0_16, %c0_17], %19 {strides = array<i32>} : memref<1x128xf32, #tpu.memory_space<vmem>>, vector<1x128xf32>,
    return
  }
  func.func @transform_0(%arg0: i32) -> (i32, i32) {
    %c0_i32 = arith.constant 0 : i32
    %c0_i32_0 = arith.constant 0 : i32
    return %c0_i32, %arg0 : i32, i32
  }
  func.func @transform_1(%arg0: i32) -> (i32, i32) {
    %c0_i32 = arith.constant 0 : i32
    %c0_i32_0 = arith.constant 0 : i32
    return %c0_i32, %arg0 : i32, i32
  }
  func.func @transform_2(%arg0: i32) -> (i32, i32) {
    %c0_i32 = arith.constant 0 : i32
    %c0_i32_0 = arith.constant 0 : i32
    %c0_i32_1 = arith.constant 0 : i32
    return %c0_i32, %c0_i32_0 : i32, i32
  }
  func.func @transform_3(%arg0: i32) -> (i32, i32) {
    %c0_i32 = arith.constant 0 : i32
    %c0_i32_0 = arith.constant 0 : i32
    %c0_i32_1 = arith.constant 0 : i32
    return %c0_i32, %c0_i32_0 : i32, i32
  }
  func.func @transform_4(%arg0: i32) -> (i32, i32) {
    %c0_i32 = arith.constant 0 : i32
    %c0_i32_0 = arith.constant 0 : i32
    %c0_i32_1 = arith.constant 0 : i32
    return %c0_i32, %c0_i32_0 : i32, i32
  }
  func.func @transform_5(%arg0: i32) -> (i32, i32) {
    %c0_i32 = arith.constant 0 : i32
    %c0_i32_0 = arith.constant 0 : i32
    %c0_i32_1 = arith.constant 0 : i32
    return %c0_i32, %c0_i32_0 : i32, i32
  }
  func.func @transform_6(%arg0: i32) -> (i32, i32) {
    %c0_i32 = arith.constant 0 : i32
    %c0_i32_0 = arith.constant 0 : i32
    %c0_i32_1 = arith.constant 0 : i32
    return %c0_i32, %c0_i32_0 : i32, i32
  }
  func.func @transform_7(%arg0: i32) -> (i32, i32) {
    %c0_i32 = arith.constant 0 : i32
    %c0_i32_0 = arith.constant 0 : i32
    return %c0_i32, %arg0 : i32, i32
  }
}

</mosaic_0001>

<llo_original>
// kernel: tpu_custom_call.1
$region0: #{tpu_custom_call.1}
  #allocation0 [shape = 'u32[]', space=smem, size = 0x4, offset = 0x4, fixed_abs, tag = 'smem constant byte address 0x4 - core index']
  #allocation1 [shape = 'u32[144,128]{1,0:T(1,128)}', space=vmem, size = 0x12000, scoped, tag = 'internal scratch']
  #allocation2 [shape = 'f32[1,1]{1,0:T(1,128)S(1)}', space=vmem, size = 0x200, scoped, tag = 'scoped memory for tpu_custom_call.1']
  %s0 = inlined_call_operand.vmem [shape: f32[4,8], index: 0, kind: input, shape index: {}]
  %s1 = inlined_call_operand.vmem [shape: f32[4,8], index: 1, kind: input, shape index: {}]
  %s2 = inlined_call_operand.vmem [shape: f32[16,4], index: 2, kind: input, shape index: {}]
  %s3 = inlined_call_operand.vmem [shape: f32[16,4], index: 3, kind: input, shape index: {}]
  %s4 = inlined_call_operand.vmem [shape: f32[16,1], index: 4, kind: input, shape index: {}]
  %s5 = inlined_call_operand.vmem [shape: f32[16,1], index: 5, kind: input, shape index: {}]
  %s6 = inlined_call_operand.<no memory space> [shape: f32[1,1], index: 6, kind: input, shape index: {}]
  %s7 = inlined_call_operand.hbm [shape: f32[1,8], index: 7, kind: output, shape index: {}]
  %s8 = sld [smem:[#allocation0]]
  $region38: #{tpu_custom_call.1} parent=0
    _
  %s10 = ssub.s32 1, %s8
  %s11 = scalar_select 0, %s10, %s8
  %v12 = vstv %s6
  %13 = vst [vmem:[#allocation2] sm:$0x1] %v12
  $region1: #{tpu_custom_call.1} parent=0
    #allocation3 [shape = 'u8[512]{0}', space=vmem, size = 0x400, scoped, tag = 'output window, operand 0, single buffered']
    #allocation4 [shape = 's32[1]{0}', space=sflag, size = 0x4, scoped, tag = 'scoped memory for tpu_custom_call.1']
    %14 = vsyncpa [#allocation4], 0
    // Predicated region
    $region2: #{tpu_custom_call.1} parent=1 // pred_check
      _
    $region3: #{tpu_custom_call.1} parent=1 // pred_check_branch
      %16 = sbr.rel (0) target = $region5
    $region4: #{tpu_custom_call.1} parent=1 // pred_region
      _
    $region5: #{tpu_custom_call.1} parent=1 // pred_fallthru
      _
    // Predicated region
    $region6: #{tpu_custom_call.1} parent=1 // pred_check
      _
    $region7: #{tpu_custom_call.1} parent=1 // pred_check_branch
      %18 = sbr.rel (0) target = $region9
    $region8: #{tpu_custom_call.1} parent=1 // pred_region
      _
    $region9: #{tpu_custom_call.1} parent=1 // pred_fallthru
      _
    // Predicated region
    $region10: #{tpu_custom_call.1} parent=1 // pred_check
      _
    $region11: #{tpu_custom_call.1} parent=1 // pred_check_branch
      %20 = sbr.rel (0) target = $region13
    $region12: #{tpu_custom_call.1} parent=1 // pred_region
      _
    $region13: #{tpu_custom_call.1} parent=1 // pred_fallthru
      _
    // Predicated region
    $region14: #{tpu_custom_call.1} parent=1 // pred_check
      _
    $region15: #{tpu_custom_call.1} parent=1 // pred_check_branch
      %22 = sbr.rel (0) target = $region17
    $region16: #{tpu_custom_call.1} parent=1 // pred_region
      _
    $region17: #{tpu_custom_call.1} parent=1 // pred_fallthru
      _
    // Predicated region
    $region18: #{tpu_custom_call.1} parent=1 // pred_check
      _
    $region19: #{tpu_custom_call.1} parent=1 // pred_check_branch
      %24 = sbr.rel (0) target = $region21
    $region20: #{tpu_custom_call.1} parent=1 // pred_region
      _
    $region21: #{tpu_custom_call.1} parent=1 // pred_fallthru
      _
    // Predicated region
    $region22: #{tpu_custom_call.1} parent=1 // pred_check
      _
    $region23: #{tpu_custom_call.1} parent=1 // pred_check_branch
      %26 = sbr.rel (0) target = $region25
    $region24: #{tpu_custom_call.1} parent=1 // pred_region
      _
    $region25: #{tpu_custom_call.1} parent=1 // pred_fallthru
      _
    // Predicated region
    $region26: #{tpu_custom_call.1} parent=1 // pred_check
      _
    $region27: #{tpu_custom_call.1} parent=1 // pred_check_branch
      %28 = sbr.rel (0) target = $region29
    $region28: #{tpu_custom_call.1} parent=1 // pred_region
      _
    $region29: #{tpu_custom_call.1} parent=1 // pred_fallthru
      _
    %v29 = vld [vmem:[%s2] sm:$0xff]
    %v30 = vld [vmem:[%s2 + $0x8] sm:$0xff]
    %v31 = vld [vmem:[%s0] sm:$0xf]
    %v32 = vld [vmem:[%s3] sm:$0xff]
    %v33 = vld [vmem:[%s3 + $0x8] sm:$0xff]
    %v34 = vld [vmem:[%s1] sm:$0xf]
    %vm35 = vcmask 31744
    %v37 = vsel %vm35, %v32, 0
    %v40 = vsel %vm35, %v33, 0
    %vm42 = vcmask 1043456
    %v44 = vsel %vm42, %v34, 0
    %46 = vmatprep.subr.mxu0 0.0
    %47 = vmatpush1.msra.mxu0 %v44
    %48 = vmatprep.subr.mxu0 0.0
    %49 = vmatpush1.msra.mxu0 0.0
    %50 = vmatprep.subr.mxu0 0.0
    %51 = vmatpush1.msra.mxu0 0.0
    %52 = vmatprep.subr.mxu0 0.0
    %53 = vmatpush1.msra.mxu0 0.0
    %54 = vmatprep.subr.mxu0 0.0
    %55 = vmatpush1.msra.mxu0 0.0
    %56 = vmatprep.subr.mxu0 0.0
    %57 = vmatpush1.msra.mxu0 0.0
    %58 = vmatprep.subr.mxu0 0.0
    %59 = vmatpush1.msra.mxu0 0.0
    %60 = vmatprep.subr.mxu0 0.0
    %61 = vmatpush1.msra.mxu0 0.0
    %62 = vmatprep.subr.mxu0 0.0
    %63 = vmatpush1.msra.mxu0 0.0
    %64 = vmatprep.subr.mxu0 0.0
    %65 = vmatpush1.msra.mxu0 0.0
    %66 = vmatprep.subr.mxu0 0.0
    %67 = vmatpush1.msra.mxu0 0.0
    %68 = vmatprep.subr.mxu0 0.0
    %69 = vmatpush1.msra.mxu0 0.0
    %70 = vmatprep.subr.mxu0 0.0
    %71 = vmatpush1.msra.mxu0 0.0
    %72 = vmatprep.subr.mxu0 0.0
    %73 = vmatpush1.msra.mxu0 0.0
    %74 = vmatprep.subr.mxu0 0.0
    %75 = vmatpush1.msra.mxu0 0.0
    %76 = vmatprep.subr.mxu0 0.0
    %77 = vmatpush1.msra.mxu0 0.0
    %78 = vmatprep.subr.mxu0 0.0
    %79 = vmatpush1.msra.mxu0 0.0
    %80 = vmatprep.subr.mxu0 0.0
    %81 = vmatpush1.msra.mxu0 0.0
    %82 = vmatprep.subr.mxu0 0.0
    %83 = vmatpush1.msra.mxu0 0.0
    %84 = vmatprep.subr.mxu0 0.0
    %85 = vmatpush1.msra.mxu0 0.0
    %86 = vmatprep.subr.mxu0 0.0
    %87 = vmatpush1.msra.mxu0 0.0
    %88 = vmatprep.subr.mxu0 0.0
    %89 = vmatpush1.msra.mxu0 0.0
    %90 = vmatprep.subr.mxu0 0.0
    %91 = vmatpush1.msra.mxu0 0.0
    %92 = vmatprep.subr.mxu0 0.0
    %93 = vmatpush1.msra.mxu0 0.0
    %94 = vmatprep.subr.mxu0 0.0
    %95 = vmatpush1.msra.mxu0 0.0
    %96 = vmatprep.subr.mxu0 0.0
    %97 = vmatpush1.msra.mxu0 0.0
    %98 = vmatprep.subr.mxu0 0.0
    %99 = vmatpush1.msra.mxu0 0.0
    %100 = vmatprep.subr.mxu0 0.0
    %101 = vmatpush1.msra.mxu0 0.0
    %102 = vmatprep.subr.mxu0 0.0
    %103 = vmatpush1.msra.mxu0 0.0
    %104 = vmatprep.subr.mxu0 0.0
    %105 = vmatpush1.msra.mxu0 0.0
    %106 = vmatprep.subr.mxu0 0.0
    %107 = vmatpush1.msra.mxu0 0.0
    %108 = vmatprep.subr.mxu0 0.0
    %109 = vmatpush1.msra.mxu0 0.0
    %110 = vmatprep.mubr.f32.mxu0 0.0
    %111 = vmatmul.mubr.f32.gmra.mrb[0].mxu0 %v37
    %v112 = vpop.f32.mrb[0].mxu0
    %v113 = vadd.f32 0.0, %v112
    %v114 = vpop.f32.mrb[0].mxu0
    %115 = vmatprep.mubr.f32.mxu0 0.0
    %116 = vmatmul.mubr.f32.gmra.mrb[0].mxu0 %v40
    %v117 = vpop.f32.mrb[0].mxu0
    %v118 = vadd.f32 0.0, %v117
    %v119 = vpop.f32.mrb[0].mxu0
    %120 = vdwg.mxu0
    %v122 = vsel %vm35, %v29, 0
    %v125 = vsel %vm35, %v30, 0
    %v128 = vsel %vm42, %v31, 0
    %130 = vmatprep.subr.mxu0 0.0
    %131 = vmatpush1.msra.mxu0 %v128
    %132 = vmatprep.subr.mxu0 0.0
    %133 = vmatpush1.msra.mxu0 0.0
    %134 = vmatprep.subr.mxu0 0.0
    %135 = vmatpush1.msra.mxu0 0.0
    %136 = vmatprep.subr.mxu0 0.0
    %137 = vmatpush1.msra.mxu0 0.0
    %138 = vmatprep.subr.mxu0 0.0
    %139 = vmatpush1.msra.mxu0 0.0
    %140 = vmatprep.subr.mxu0 0.0
    %141 = vmatpush1.msra.mxu0 0.0
    %142 = vmatprep.subr.mxu0 0.0
    %143 = vmatpush1.msra.mxu0 0.0
    %144 = vmatprep.subr.mxu0 0.0
    %145 = vmatpush1.msra.mxu0 0.0
    %146 = vmatprep.subr.mxu0 0.0
    %147 = vmatpush1.msra.mxu0 0.0
    %148 = vmatprep.subr.mxu0 0.0
    %149 = vmatpush1.msra.mxu0 0.0
    %150 = vmatprep.subr.mxu0 0.0
    %151 = vmatpush1.msra.mxu0 0.0
    %152 = vmatprep.subr.mxu0 0.0
    %153 = vmatpush1.msra.mxu0 0.0
    %154 = vmatprep.subr.mxu0 0.0
    %155 = vmatpush1.msra.mxu0 0.0
    %156 = vmatprep.subr.mxu0 0.0
    %157 = vmatpush1.msra.mxu0 0.0
    %158 = vmatprep.subr.mxu0 0.0
    %159 = vmatpush1.msra.mxu0 0.0
    %160 = vmatprep.subr.mxu0 0.0
    %161 = vmatpush1.msra.mxu0 0.0
    %162 = vmatprep.subr.mxu0 0.0
    %163 = vmatpush1.msra.mxu0 0.0
    %164 = vmatprep.subr.mxu0 0.0
    %165 = vmatpush1.msra.mxu0 0.0
    %166 = vmatprep.subr.mxu0 0.0
    %167 = vmatpush1.msra.mxu0 0.0
    %168 = vmatprep.subr.mxu0 0.0
    %169 = vmatpush1.msra.mxu0 0.0
    %170 = vmatprep.subr.mxu0 0.0
    %171 = vmatpush1.msra.mxu0 0.0
    %172 = vmatprep.subr.mxu0 0.0
    %173 = vmatpush1.msra.mxu0 0.0
    %174 = vmatprep.subr.mxu0 0.0
    %175 = vmatpush1.msra.mxu0 0.0
    %176 = vmatprep.subr.mxu0 0.0
    %177 = vmatpush1.msra.mxu0 0.0
    %178 = vmatprep.subr.mxu0 0.0
    %179 = vmatpush1.msra.mxu0 0.0
    %180 = vmatprep.subr.mxu0 0.0
    %181 = vmatpush1.msra.mxu0 0.0
    %182 = vmatprep.subr.mxu0 0.0
    %183 = vmatpush1.msra.mxu0 0.0
    %184 = vmatprep.subr.mxu0 0.0
    %185 = vmatpush1.msra.mxu0 0.0
    %186 = vmatprep.subr.mxu0 0.0
    %187 = vmatpush1.msra.mxu0 0.0
    %188 = vmatprep.subr.mxu0 0.0
    %189 = vmatpush1.msra.mxu0 0.0
    %190 = vmatprep.subr.mxu0 0.0
    %191 = vmatpush1.msra.mxu0 0.0
    %192 = vmatprep.subr.mxu0 0.0
    %193 = vmatpush1.msra.mxu0 0.0
    %194 = vmatprep.mubr.f32.mxu0 0.0
    %195 = vmatmul.mubr.f32.gmra.mrb[0].mxu0 %v122
    %v196 = vpop.f32.mrb[0].mxu0
    %v197 = vadd.f32 %v113, %v196
    %v198 = vpop.f32.mrb[0].mxu0
    %199 = vmatprep.mubr.f32.mxu0 0.0
    %200 = vmatmul.mubr.f32.gmra.mrb[0].mxu0 %v125
    %v201 = vpop.f32.mrb[0].mxu0
    %v202 = vadd.f32 %v118, %v201
    %v203 = vpop.f32.mrb[0].mxu0
    %204 = vdwg.mxu0
    %v205 = vld [vmem:[%s4] sm:$0xff]
    %v206 = vld [vmem:[%s4 + $0x8] sm:$0xff]
    %208 = vset.pattern.permute.xlu0 0
    %209 = vperm.xlu0 %208, %v205
    %v210 = vpop.permute.xlu0 %209
    %213 = vset.pattern.permute.xlu0 0
    %214 = vperm.xlu0 %213, %v206
    %v215 = vpop.permute.xlu0 %214
    %v217 = vadd.f32 %v197, %v210
    %v218 = vadd.f32 %v202, %v215
    %v219 = vmax.f32 %v217, 0.0
    %v220 = vmax.f32 %v218, 0.0
    %v221 = vld [vmem:[%s5] sm:$0xff]
    %v222 = vld [vmem:[%s5 + $0x8] sm:$0xff]
    %224 = vset.pattern.permute.xlu0 0
    %225 = vperm.xlu0 %224, %v221
    %v226 = vpop.permute.xlu0 %225
    %229 = vset.pattern.permute.xlu0 0
    %230 = vperm.xlu0 %229, %v222
    %v231 = vpop.permute.xlu0 %230
    %v233 = vmul.f32 %v219, %v226
    %v234 = vmul.f32 %v220, %v231
    %v235 = vadd.f32 %v233, %v234
    %v236 = vrot.slane %v235, 4
    %v237 = vadd.f32 %v235, %v236
    %v238 = vrot.slane %v237, 2
    %v239 = vadd.f32 %v237, %v238
    %v240 = vrot.slane %v239, 1
    %v241 = vadd.f32 %v239, %v240
    %v242 = vld [vmem:[#allocation2] sm:$0x1]
    %244 = vset.pattern.permute.xlu0 0
    %245 = vperm.xlu0 %244, %v242
    %v246 = vpop.permute.xlu0 %245
    %v248 = vlaneseq
    %v249 = vshrl.u32 %v248, 7
    %v250 = vsub.s32 0, %v249
    %v251 = vrot.slane %v246, %v250
    %v252 = vadd.f32 %v241, %v251
    %253 = vst [vmem:[#allocation3] sm:$0x1] %v252
    // Predicated region
    $region30: #{tpu_custom_call.1} parent=1 // pred_check
      _
    $region31: #{tpu_custom_call.1} parent=1 // pred_check_branch
      %255 = sbr.rel (0) target = $region33
    $region32: #{tpu_custom_call.1} parent=1 // pred_region
      %s257 = ssub.s32 16, 16
      %258 = vsyncadd [#allocation4], %s257
      %s260 = sshll.u32 [#allocation3], 4
      %s261 = int_to_ptr.vmem [resolvable:$true] %s260
      %263 = dma.vmem_to_hbm [thread:$0]  %s261, 16, %s7, [#allocation4]
    $region33: #{tpu_custom_call.1} parent=1 // pred_fallthru
      _
    // Predicated region
    $region34: #{tpu_custom_call.1} parent=1 // pred_check
      _
    $region35: #{tpu_custom_call.1} parent=1 // pred_check_branch
      %265 = sbr.rel (0) target = $region37
    $region36: #{tpu_custom_call.1} parent=1 // pred_region
      %266 = dma.done [#allocation4], 16
    $region37: #{tpu_custom_call.1} parent=1 // pred_fallthru
      _
    %267 = vsyncpa [#allocation4], 1

</llo_original>
